<compile_context>
chip_gen: v7x
topology: tpu7x:2x2x1
jax: 0.10.0
libtpu: 0.0.40
codegen_flags: <defaults>
</compile_context>

<pallas_src>
import math

import jax
import jax.numpy as jnp
from jax.experimental import pallas as pl
from jax.experimental.pallas import tpu as pltpu


LN_EPS = 1e-5
_GELU_C = math.sqrt(2.0 / math.pi)


def _pick_tile(dim, cap, align):
    """Largest divisor of `dim` that is <= cap and a multiple of `align`; if the
    whole dim fits under the cap just use it (a full-extent block is always legal)."""
    if dim <= cap:
        return dim
    start = (cap // align) * align
    for d in range(start, align - 1, -align):
        if dim % d == 0:
            return d
    # TODO(synk): pad + mask awkward row counts instead of a full-dim fallback.
    return dim


# ------------------------------- fused kernel -------------------------------


def _mlp_concat_kernel(x_ref, attn_ref, g_ref, b_ref,
                       w1x_ref, w1a_ref, b1_ref, w2_ref,
                       o_ref, acc_ref, xn_ref, at_ref):
    """Grid = (row tiles i, hidden tiles j). j is the c_proj reduction axis."""
    j = pl.program_id(1)

    @pl.when(j == 0)
    def _():
        acc_ref[...] = jnp.zeros_like(acc_ref)
        # LayerNorm hoisted out of the j loop: compute once per row tile, stash the
        # result (and attn) in the MXU operand dtype (bf16) for reuse on every j.
        x = x_ref[...].astype(jnp.float32)
        mu = jnp.mean(x, axis=-1, keepdims=True)
        xc = x - mu
        var = jnp.mean(xc * xc, axis=-1, keepdims=True)
        xn = xc * jax.lax.rsqrt(var + LN_EPS)
        xn = xn * g_ref[...].astype(jnp.float32) + b_ref[...].astype(jnp.float32)
        xn_ref[...] = xn.astype(xn_ref.dtype)
        at_ref[...] = attn_ref[...].astype(at_ref.dtype)

    # --- c_fc on the virtual concat [ln(x), attn]: two bf16 MXU dots, f32 accum ----
    h = jnp.dot(xn_ref[...], w1x_ref[...], preferred_element_type=jnp.float32)
    h = h + jnp.dot(at_ref[...], w1a_ref[...], preferred_element_type=jnp.float32)
    h = h + b1_ref[...].astype(jnp.float32)

    # --- GELU (tanh approximation), kept in f32 on VPU/EUP (folded polynomial) -----
    h = 0.5 * h * (1.0 + jnp.tanh(_GELU_C * h * (1.0 + 0.044715 * h * h)))

    # --- c_proj (no bias): bf16 MXU operand, accumulate this hidden tile in f32 ----
    acc_ref[...] += jnp.dot(h.astype(w2_ref.dtype), w2_ref[...],
                            preferred_element_type=jnp.float32)

    @pl.when(j == pl.num_programs(1) - 1)
    def _():
        o_ref[...] = acc_ref[...].astype(o_ref.dtype)


# --------------------------- module-level wrapper ---------------------------


def mlp_concat(params, x, attn, *, tm_cap=1024, tn_cap=512):
    """Pallas implementation of MLPConcat.forward."""
    B, T, C = x.shape
    H = params["w_fc"].shape[1]          # MLP_SCALE * C
    M = B * T

    x2d = x.reshape(M, C)
    a2d = attn.reshape(M, C)

    # Weights live in HBM as bf16 (in a real model they'd be stored bf16 up front;
    # the cast here is a one-time weight-prep op, not a per-activation pre-scale).
    w_fc = params["w_fc"].astype(jnp.bfloat16)       # (2C, H); split via index_map
    w_proj = params["w_proj"].astype(jnp.bfloat16)   # (H, C)

    tm = _pick_tile(M, tm_cap, 8)
    tn = _pick_tile(H, tn_cap, 128)
    grid = (M // tm, H // tn)

    n_row_tiles = M // tm
    w_bytes = 2 * (2 * C * H + H * C)                # one full bf16 weight pass
    cost = pl.CostEstimate(
        flops=6 * M * C * H + 12 * M * H,            # two c_fc halves + c_proj + gelu
        transcendentals=M * H,                       # tanh
        bytes_accessed=(2 * M * C * x.dtype.itemsize     # x + attn reads
                        + n_row_tiles * w_bytes          # weight panels re-streamed
                        + 2 * H + 8 * C                  # c_fc bias + LN params
                        + M * C * x.dtype.itemsize),     # output
    )

    y2d = pl.pallas_call(
        _mlp_concat_kernel,
        out_shape=jax.ShapeDtypeStruct((M, C), x.dtype),
        grid=grid,
        in_specs=[
            pl.BlockSpec((tm, C), lambda i, j: (i, 0)),    # x rows (full channels)
            pl.BlockSpec((tm, C), lambda i, j: (i, 0)),    # attn rows
            pl.BlockSpec((1, C), lambda i, j: (0, 0)),     # LayerNorm gamma
            pl.BlockSpec((1, C), lambda i, j: (0, 0)),     # LayerNorm beta
            pl.BlockSpec((C, tn), lambda i, j: (0, j)),    # W_fc block-row 0: ln(x) half
            pl.BlockSpec((C, tn), lambda i, j: (1, j)),    # W_fc block-row 1: attn half
            pl.BlockSpec((1, tn), lambda i, j: (0, j)),    # c_fc bias
            pl.BlockSpec((tn, C), lambda i, j: (j, 0)),    # W_proj rows
        ],
        out_specs=pl.BlockSpec((tm, C), lambda i, j: (i, 0)),   # lane-dense (tm, C)
        scratch_shapes=[
            pltpu.VMEM((tm, C), jnp.float32),    # f32 c_proj accumulator
            pltpu.VMEM((tm, C), jnp.bfloat16),   # hoisted LayerNorm output (bf16)
            pltpu.VMEM((tm, C), jnp.bfloat16),   # attn cast once (bf16)
        ],
        compiler_params=pltpu.CompilerParams(
            dimension_semantics=("parallel", "arbitrary"),
            vmem_limit_bytes=48 * 1024 * 1024),
        cost_estimate=cost,
    )(x2d, a2d, params["ln_g"], params["ln_b"], w_fc, w_fc, params["b_fc"], w_proj)

    return y2d.reshape(B, T, C)


# ------------------------------ pure-JAX reference ------------------------------


def ref_forward(params, x, attn):
    mu = jnp.mean(x, axis=-1, keepdims=True)
    var = jnp.mean((x - mu) ** 2, axis=-1, keepdims=True)
    xn = (x - mu) / jnp.sqrt(var + LN_EPS)
    xn = xn * params["ln_g"][0] + params["ln_b"][0]
    z = jnp.concatenate([xn, attn], axis=-1)
    h = z @ params["w_fc"] + params["b_fc"][0]
    h = 0.5 * h * (1.0 + jnp.tanh(_GELU_C * (h + 0.044715 * h ** 3)))
    return h @ params["w_proj"]


# ------------------------------------ main ------------------------------------

if __name__ == "__main__":
    B, T, C = 2, 16, 32          # n_embd = 32; MLP_SCALE = 4 -> hidden H = 128
    H = 4 * C

    key = jax.random.PRNGKey(0)
    k1, k2, k3, k4, k5, kx, ka = jax.random.split(key, 7)

    # Deterministic synthetic parameters.  Linear weights are stored as (in, out)
    # = W^T relative to nn.Linear's (out, in), so y = x @ W_T (+ b) == x @ W^T (+ b).
    params = {
        "w_fc": jax.random.normal(k1, (2 * C, H), jnp.float32) / math.sqrt(2 * C),
        "b_fc": 0.1 * jax.random.normal(k2, (1, H), jnp.float32),
        "w_proj": jax.random.normal(k3, (H, C), jnp.float32) / math.sqrt(H),  # bias=False
        "ln_g": 1.0 + 0.1 * jax.random.normal(k4, (1, C), jnp.float32),
        "ln_b": 0.1 * jax.random.normal(k5, (1, C), jnp.float32),
    }

    x = jax.random.normal(kx, (B, T, C), jnp.float32)
    attn = jax.random.normal(ka, (B, T, C), jnp.float32)

    y = mlp_concat(params, x, attn)
    y = jax.block_until_ready(y)

    y_ref = ref_forward(params, x, attn)
    assert y.shape == (B, T, C)
    # Tolerance reflects bf16 MXU operands/weights vs the pure-f32 reference.
    assert jnp.allclose(y, y_ref, atol=5e-2, rtol=5e-2), "mismatch vs reference"

    print("KERNEL_OK")
</pallas_src>

<mosaic_0001>
module attributes {stable_mosaic.version = 11 : i64} {
  func.func @_mlp_concat_kernel(%arg0: i32, %arg1: i32, %arg2: memref<32x32xf32, #tpu.memory_space<vmem>>, %arg3: memref<32x32xf32, #tpu.memory_space<vmem>>, %arg4: memref<1x32xf32, #tpu.memory_space<vmem>>, %arg5: memref<1x32xf32, #tpu.memory_space<vmem>>, %arg6: memref<32x128xbf16, #tpu.memory_space<vmem>>, %arg7: memref<32x128xbf16, #tpu.memory_space<vmem>>, %arg8: memref<1x128xf32, #tpu.memory_space<vmem>>, %arg9: memref<128x32xbf16, #tpu.memory_space<vmem>>, %arg10: memref<32x32xf32, #tpu.memory_space<vmem>>, %arg11: memref<32x32xf32, #tpu.memory_space<vmem>>, %arg12: memref<32x32xbf16, #tpu.memory_space<vmem>>, %arg13: memref<32x32xbf16, #tpu.memory_space<vmem>>) attributes {dimension_semantics = [#tpu.dimension_semantics<parallel>, #tpu.dimension_semantics<arbitrary>], iteration_bounds = array<i64: 1, 1>, scalar_prefetch = 0 : i64, scratch_operands = 3 : i64, tpu.core_type = #tpu.core_type<tc>, window_params = [{transform_indices = @transform_0, window_bounds = array<i64: 32, 32>}, {transform_indices = @transform_1, window_bounds = array<i64: 32, 32>}, {pipeline_mode = #tpu.pipeline_mode<synchronous>, transform_indices = @transform_2, window_bounds = array<i64: 1, 32>}, {pipeline_mode = #tpu.pipeline_mode<synchronous>, transform_indices = @transform_3, window_bounds = array<i64: 1, 32>}, {transform_indices = @transform_4, window_bounds = array<i64: 32, 128>}, {transform_indices = @transform_5, window_bounds = array<i64: 32, 128>}, {transform_indices = @transform_6, window_bounds = array<i64: 1, 128>}, {transform_indices = @transform_7, window_bounds = array<i64: 128, 32>}, {transform_indices = @transform_8, window_bounds = array<i64: 32, 32>}]} {
    %c0_i32 = arith.constant 0 : i32
    %0 = arith.cmpi eq, %arg1, %c0_i32 : i32
    %1 = arith.extui %0 : i1 to i32
    %c0_i32_0 = arith.constant 0 : i32
    %2 = arith.cmpi ne, %1, %c0_i32_0 : i32
    scf.if %2 {
      %cst_25 = arith.constant 0.000000e+00 : f32
      %36 = vector.broadcast %cst_25 : f32 to vector<32x32xf32>
      %c0_26 = arith.constant 0 : index
      %c0_27 = arith.constant 0 : index
      %37 = vector.load %arg11[%c0_26, %c0_27] : memref<32x32xf32, #tpu.memory_space<vmem>>, vector<32x32xf32>
      tpu.vector_store %arg11[%c0_26, %c0_27], %36 {strides = array<i32>} : memref<32x32xf32, #tpu.memory_space<vmem>>, vector<32x32xf32>,
      %c0_28 = arith.constant 0 : index
      %c0_29 = arith.constant 0 : index
      %38 = vector.load %arg2[%c0_28, %c0_29] : memref<32x32xf32, #tpu.memory_space<vmem>>, vector<32x32xf32>
      %cst_30 = arith.constant dense<0.000000e+00> : vector<32xf32>
      %39 = vector.multi_reduction <add>, %38, %cst_30 [1] : vector<32x32xf32> to vector<32xf32>
      %40 = vector.shape_cast %39 : vector<32xf32> to vector<32x1xf32>
      %cst_31 = arith.constant 3.200000e+01 : f32
      %41 = vector.broadcast %cst_31 : f32 to vector<32x1xf32>
      %42 = arith.divf %40, %41 : vector<32x1xf32>
      %43 = vector.broadcast %42 : vector<32x1xf32> to vector<32x32xf32>
      %44 = arith.subf %38, %43 : vector<32x32xf32>
      %45 = arith.mulf %44, %44 : vector<32x32xf32>
      %cst_32 = arith.constant dense<0.000000e+00> : vector<32xf32>
      %46 = vector.multi_reduction <add>, %45, %cst_32 [1] : vector<32x32xf32> to vector<32xf32>
      %47 = vector.shape_cast %46 : vector<32xf32> to vector<32x1xf32>
      %cst_33 = arith.constant 3.200000e+01 : f32
      %48 = vector.broadcast %cst_33 : f32 to vector<32x1xf32>
      %49 = arith.divf %47, %48 : vector<32x1xf32>
      %cst_34 = arith.constant 9.99999974E-6 : f32
      %50 = vector.broadcast %cst_34 : f32 to vector<32x1xf32>
      %51 = arith.addf %49, %50 : vector<32x1xf32>
      %52 = math.rsqrt %51 : vector<32x1xf32>
      %53 = vector.broadcast %52 : vector<32x1xf32> to vector<32x32xf32>
      %54 = arith.mulf %44, %53 : vector<32x32xf32>
      %c0_35 = arith.constant 0 : index
      %c0_36 = arith.constant 0 : index
      %55 = vector.load %arg4[%c0_35, %c0_36] : memref<1x32xf32, #tpu.memory_space<vmem>>, vector<1x32xf32>
      %56 = vector.broadcast %55 : vector<1x32xf32> to vector<32x32xf32>
      %57 = arith.mulf %54, %56 : vector<32x32xf32>
      %c0_37 = arith.constant 0 : index
      %c0_38 = arith.constant 0 : index
      %58 = vector.load %arg5[%c0_37, %c0_38] : memref<1x32xf32, #tpu.memory_space<vmem>>, vector<1x32xf32>
      %59 = vector.broadcast %58 : vector<1x32xf32> to vector<32x32xf32>
      %60 = arith.addf %57, %59 : vector<32x32xf32>
      %61 = arith.truncf %60 : vector<32x32xf32> to vector<32x32xbf16>
      %c0_39 = arith.constant 0 : index
      %c0_40 = arith.constant 0 : index
      %62 = vector.load %arg12[%c0_39, %c0_40] : memref<32x32xbf16, #tpu.memory_space<vmem>>, vector<32x32xbf16>
      tpu.vector_store %arg12[%c0_39, %c0_40], %61 {strides = array<i32>} : memref<32x32xbf16, #tpu.memory_space<vmem>>, vector<32x32xbf16>,
      %c0_41 = arith.constant 0 : index
      %c0_42 = arith.constant 0 : index
      %63 = vector.load %arg3[%c0_41, %c0_42] : memref<32x32xf32, #tpu.memory_space<vmem>>, vector<32x32xf32>
      %64 = arith.truncf %63 : vector<32x32xf32> to vector<32x32xbf16>
      %c0_43 = arith.constant 0 : index
      %c0_44 = arith.constant 0 : index
      %65 = vector.load %arg13[%c0_43, %c0_44] : memref<32x32xbf16, #tpu.memory_space<vmem>>, vector<32x32xbf16>
      tpu.vector_store %arg13[%c0_43, %c0_44], %64 {strides = array<i32>} : memref<32x32xbf16, #tpu.memory_space<vmem>>, vector<32x32xbf16>,
    } else {
    }
    %c0 = arith.constant 0 : index
    %c0_1 = arith.constant 0 : index
    %3 = vector.load %arg12[%c0, %c0_1] : memref<32x32xbf16, #tpu.memory_space<vmem>>, vector<32x32xbf16>
    %c0_2 = arith.constant 0 : index
    %c0_3 = arith.constant 0 : index
    %4 = vector.load %arg6[%c0_2, %c0_3] : memref<32x128xbf16, #tpu.memory_space<vmem>>, vector<32x128xbf16>
    %cst = arith.constant dense<0.000000e+00> : vector<32x128xf32>
    %5 = tpu.matmul %3, %4, %cst {dimension_numbers = #tpu.dot_dimension_numbers<[1], [0], [0], [1], [0, 0, 1, 1], [], []>} : vector<32x32xbf16>, vector<32x128xbf16>, vector<32x128xf32> -> vector<32x128xf32>
    %c0_4 = arith.constant 0 : index
    %c0_5 = arith.constant 0 : index
    %6 = vector.load %arg13[%c0_4, %c0_5] : memref<32x32xbf16, #tpu.memory_space<vmem>>, vector<32x32xbf16>
    %c0_6 = arith.constant 0 : index
    %c0_7 = arith.constant 0 : index
    %7 = vector.load %arg7[%c0_6, %c0_7] : memref<32x128xbf16, #tpu.memory_space<vmem>>, vector<32x128xbf16>
    %cst_8 = arith.constant dense<0.000000e+00> : vector<32x128xf32>
    %8 = tpu.matmul %6, %7, %cst_8 {dimension_numbers = #tpu.dot_dimension_numbers<[1], [0], [0], [1], [0, 0, 1, 1], [], []>} : vector<32x32xbf16>, vector<32x128xbf16>, vector<32x128xf32> -> vector<32x128xf32>
    %9 = arith.addf %5, %8 : vector<32x128xf32>
    %c0_9 = arith.constant 0 : index
    %c0_10 = arith.constant 0 : index
    %10 = vector.load %arg8[%c0_9, %c0_10] : memref<1x128xf32, #tpu.memory_space<vmem>>, vector<1x128xf32>
    %11 = vector.broadcast %10 : vector<1x128xf32> to vector<32x128xf32>
    %12 = arith.addf %9, %11 : vector<32x128xf32>
    %cst_11 = arith.constant 5.000000e-01 : f32
    %13 = vector.broadcast %cst_11 : f32 to vector<32x128xf32>
    %14 = arith.mulf %13, %12 : vector<32x128xf32>
    %cst_12 = arith.constant 0.797884583 : f32
    %15 = vector.broadcast %cst_12 : f32 to vector<32x128xf32>
    %16 = arith.mulf %15, %12 : vector<32x128xf32>
    %cst_13 = arith.constant 4.471500e-02 : f32
    %17 = vector.broadcast %cst_13 : f32 to vector<32x128xf32>
    %18 = arith.mulf %17, %12 : vector<32x128xf32>
    %19 = arith.mulf %18, %12 : vector<32x128xf32>
    %cst_14 = arith.constant 1.000000e+00 : f32
    %20 = vector.broadcast %cst_14 : f32 to vector<32x128xf32>
    %21 = arith.addf %20, %19 : vector<32x128xf32>
    %22 = arith.mulf %16, %21 : vector<32x128xf32>
    %23 = math.tanh %22 : vector<32x128xf32>
    %cst_15 = arith.constant 1.000000e+00 : f32
    %24 = vector.broadcast %cst_15 : f32 to vector<32x128xf32>
    %25 = arith.addf %24, %23 : vector<32x128xf32>
    %26 = arith.mulf %14, %25 : vector<32x128xf32>
    %c0_16 = arith.constant 0 : index
    %c0_17 = arith.constant 0 : index
    %27 = vector.load %arg11[%c0_16, %c0_17] : memref<32x32xf32, #tpu.memory_space<vmem>>, vector<32x32xf32>
    %28 = arith.truncf %26 : vector<32x128xf32> to vector<32x128xbf16>
    %c0_18 = arith.constant 0 : index
    %c0_19 = arith.constant 0 : index
    %29 = vector.load %arg9[%c0_18, %c0_19] : memref<128x32xbf16, #tpu.memory_space<vmem>>, vector<128x32xbf16>
    %cst_20 = arith.constant dense<0.000000e+00> : vector<32x32xf32>
    %30 = tpu.matmul %28, %29, %cst_20 {dimension_numbers = #tpu.dot_dimension_numbers<[1], [0], [0], [1], [0, 0, 1, 1], [], []>} : vector<32x128xbf16>, vector<128x32xbf16>, vector<32x32xf32> -> vector<32x32xf32>
    %31 = arith.addf %27, %30 : vector<32x32xf32>
    %c0_21 = arith.constant 0 : index
    %c0_22 = arith.constant 0 : index
    %32 = vector.load %arg11[%c0_21, %c0_22] : memref<32x32xf32, #tpu.memory_space<vmem>>, vector<32x32xf32>
    tpu.vector_store %arg11[%c0_21, %c0_22], %31 {strides = array<i32>} : memref<32x32xf32, #tpu.memory_space<vmem>>, vector<32x32xf32>,
    %c0_i32_23 = arith.constant 0 : i32
    %33 = arith.cmpi eq, %arg1, %c0_i32_23 : i32
    %34 = arith.extui %33 : i1 to i32
    %c0_i32_24 = arith.constant 0 : i32
    %35 = arith.cmpi ne, %34, %c0_i32_24 : i32
    scf.if %35 {
      %c0_25 = arith.constant 0 : index
      %c0_26 = arith.constant 0 : index
      %36 = vector.load %arg11[%c0_25, %c0_26] : memref<32x32xf32, #tpu.memory_space<vmem>>, vector<32x32xf32>
      %c0_27 = arith.constant 0 : index
      %c0_28 = arith.constant 0 : index
      %37 = vector.load %arg10[%c0_27, %c0_28] : memref<32x32xf32, #tpu.memory_space<vmem>>, vector<32x32xf32>
      tpu.vector_store %arg10[%c0_27, %c0_28], %36 {strides = array<i32>} : memref<32x32xf32, #tpu.memory_space<vmem>>, vector<32x32xf32>,
    } else {
    }
    return
  }
  func.func @transform_0(%arg0: i32, %arg1: i32) -> (i32, i32) {
    %c0_i32 = arith.constant 0 : i32
    %c0_i32_0 = arith.constant 0 : i32
    return %arg0, %c0_i32 : i32, i32
  }
  func.func @transform_1(%arg0: i32, %arg1: i32) -> (i32, i32) {
    %c0_i32 = arith.constant 0 : i32
    %c0_i32_0 = arith.constant 0 : i32
    return %arg0, %c0_i32 : i32, i32
  }
  func.func @transform_2(%arg0: i32, %arg1: i32) -> (i32, i32) {
    %c0_i32 = arith.constant 0 : i32
    %c0_i32_0 = arith.constant 0 : i32
    %c0_i32_1 = arith.constant 0 : i32
    return %c0_i32, %c0_i32_0 : i32, i32
  }
  func.func @transform_3(%arg0: i32, %arg1: i32) -> (i32, i32) {
    %c0_i32 = arith.constant 0 : i32
    %c0_i32_0 = arith.constant 0 : i32
    %c0_i32_1 = arith.constant 0 : i32
    return %c0_i32, %c0_i32_0 : i32, i32
  }
  func.func @transform_4(%arg0: i32, %arg1: i32) -> (i32, i32) {
    %c0_i32 = arith.constant 0 : i32
    %c0_i32_0 = arith.constant 0 : i32
    return %c0_i32, %arg1 : i32, i32
  }
  func.func @transform_5(%arg0: i32, %arg1: i32) -> (i32, i32) {
    %c1_i32 = arith.constant 1 : i32
    %c0_i32 = arith.constant 0 : i32
    return %c1_i32, %arg1 : i32, i32
  }
  func.func @transform_6(%arg0: i32, %arg1: i32) -> (i32, i32) {
    %c0_i32 = arith.constant 0 : i32
    %c0_i32_0 = arith.constant 0 : i32
    return %c0_i32, %arg1 : i32, i32
  }
  func.func @transform_7(%arg0: i32, %arg1: i32) -> (i32, i32) {
    %c0_i32 = arith.constant 0 : i32
    %c0_i32_0 = arith.constant 0 : i32
    return %arg1, %c0_i32 : i32, i32
  }
  func.func @transform_8(%arg0: i32, %arg1: i32) -> (i32, i32) {
    %c0_i32 = arith.constant 0 : i32
    %c0_i32_0 = arith.constant 0 : i32
    return %arg0, %c0_i32 : i32, i32
  }
}

</mosaic_0001>

<llo_original>
// kernel: tpu_custom_call.1
$region0: #{tpu_custom_call.1}
  #allocation0 [shape = 'u32[]', space=smem, size = 0x4, offset = 0x4, fixed_abs, tag = 'smem constant byte address 0x4 - core index']
  #allocation1 [shape = 'u32[144,128]{1,0:T(1,128)}', space=vmem, size = 0x12000, scoped, tag = 'internal scratch']
  #allocation2 [shape = 'f32[32,32]{1,0:T(8,128)}', space=vmem, size = 0x4000, scoped, tag = 'scratch operand']
  #allocation3 [shape = 'bf16[32,32]{1,0:T(16,128)(2,1)}', space=vmem, size = 0x2000, scoped, tag = 'scratch operand']
  #allocation4 [shape = 'bf16[32,32]{1,0:T(16,128)(2,1)}', space=vmem, size = 0x2000, scoped, tag = 'scratch operand']
  %s0 = inlined_call_operand.vmem [shape: f32[32,32], index: 0, kind: input, shape index: {}]
  %s1 = inlined_call_operand.vmem [shape: f32[32,32], index: 1, kind: input, shape index: {}]
  %s2 = inlined_call_operand.vmem [shape: f32[1,32], index: 2, kind: input, shape index: {}]
  %s3 = inlined_call_operand.vmem [shape: f32[1,32], index: 3, kind: input, shape index: {}]
  %s4 = inlined_call_operand.hbm [shape: bf16[64,128], index: 4, kind: input, shape index: {}]
  %s5 = inlined_call_operand.vmem [shape: bf16[64,128], index: 5, kind: input, shape index: {}]
  %s6 = inlined_call_operand.vmem [shape: f32[1,128], index: 6, kind: input, shape index: {}]
  %s7 = inlined_call_operand.vmem [shape: bf16[128,32], index: 7, kind: input, shape index: {}]
  %s8 = inlined_call_operand.hbm [shape: f32[32,32], index: 8, kind: output, shape index: {}]
  %s9 = sld [smem:[#allocation0]]
  $region54: #{tpu_custom_call.1} parent=0
    _
  %s11 = ssub.s32 1, %s9
  %s12 = scalar_select 0, %s11, %s9
  $region1: #{tpu_custom_call.1} parent=0
    #allocation5 [shape = 'u8[8192]{0}', space=vmem, size = 0x2000, scoped, tag = 'input window, operand 4, single buffered']
    #allocation6 [shape = 's32[1]{0}', space=sflag, size = 0x4, scoped, tag = 'scoped memory for tpu_custom_call.1']
    #allocation7 [shape = 's32[1]{0}', space=sflag, size = 0x4, scoped, tag = 'scoped memory for tpu_custom_call.1']
    #allocation8 [shape = 'u8[16384]{0}', space=vmem, size = 0x4000, scoped, tag = 'output window, operand 0, single buffered']
    %13 = vsyncpa [#allocation6], 0
    %14 = vsyncpa [#allocation7], 0
    // Predicated region
    $region2: #{tpu_custom_call.1} parent=1 // pred_check
      _
    $region3: #{tpu_custom_call.1} parent=1 // pred_check_branch
      %16 = sbr.rel (0) target = $region5
    $region4: #{tpu_custom_call.1} parent=1 // pred_region
      _
    $region5: #{tpu_custom_call.1} parent=1 // pred_fallthru
      _
    // Predicated region
    $region6: #{tpu_custom_call.1} parent=1 // pred_check
      _
    $region7: #{tpu_custom_call.1} parent=1 // pred_check_branch
      %18 = sbr.rel (0) target = $region9
    $region8: #{tpu_custom_call.1} parent=1 // pred_region
      _
    $region9: #{tpu_custom_call.1} parent=1 // pred_fallthru
      _
    // Predicated region
    $region10: #{tpu_custom_call.1} parent=1 // pred_check
      _
    $region11: #{tpu_custom_call.1} parent=1 // pred_check_branch
      %20 = sbr.rel (0) target = $region13
    $region12: #{tpu_custom_call.1} parent=1 // pred_region
      _
    $region13: #{tpu_custom_call.1} parent=1 // pred_fallthru
      _
    // Predicated region
    $region14: #{tpu_custom_call.1} parent=1 // pred_check
      _
    $region15: #{tpu_custom_call.1} parent=1 // pred_check_branch
      %22 = sbr.rel (0) target = $region17
    $region16: #{tpu_custom_call.1} parent=1 // pred_region
      _
    $region17: #{tpu_custom_call.1} parent=1 // pred_fallthru
      _
    // Predicated region
    $region18: #{tpu_custom_call.1} parent=1 // pred_check
      _
    $region19: #{tpu_custom_call.1} parent=1 // pred_check_branch
      %24 = sbr.rel (0) target = $region21
    $region20: #{tpu_custom_call.1} parent=1 // pred_region
      %s26 = ssub.s32 256, 256
      %27 = vsyncadd [#allocation6], %s26
      %s28 = sshll.u32 [#allocation5], 4
      %s29 = int_to_ptr.vmem [resolvable:$true] %s28
      %34 = dma.hbm_to_vmem [thread:$0]  %s4, 256, %s29, [#allocation6], 64, 64, 4
    $region21: #{tpu_custom_call.1} parent=1 // pred_fallthru
      _
    // Predicated region
    $region22: #{tpu_custom_call.1} parent=1 // pred_check
      _
    $region23: #{tpu_custom_call.1} parent=1 // pred_check_branch
      %36 = sbr.rel (0) target = $region25
    $region24: #{tpu_custom_call.1} parent=1 // pred_region
      %s37 = scalar_lea.vmem %s5, 16
    $region25: #{tpu_custom_call.1} parent=1 // pred_fallthru
      _
    // Predicated region
    $region26: #{tpu_custom_call.1} parent=1 // pred_check
      _
    $region27: #{tpu_custom_call.1} parent=1 // pred_check_branch
      %39 = sbr.rel (0) target = $region29
    $region28: #{tpu_custom_call.1} parent=1 // pred_region
      _
    $region29: #{tpu_custom_call.1} parent=1 // pred_fallthru
      _
    // Predicated region
    $region30: #{tpu_custom_call.1} parent=1 // pred_check
      _
    $region31: #{tpu_custom_call.1} parent=1 // pred_check_branch
      %41 = sbr.rel (0) target = $region33
    $region32: #{tpu_custom_call.1} parent=1 // pred_region
      _
    $region33: #{tpu_custom_call.1} parent=1 // pred_fallthru
      _
    // Predicated region
    $region34: #{tpu_custom_call.1} parent=1 // pred_check
      _
    $region35: #{tpu_custom_call.1} parent=1 // pred_check_branch
      %43 = sbr.rel (0) target = $region37
    $region36: #{tpu_custom_call.1} parent=1 // pred_region
      %44 = dma.done [#allocation6], 256
    $region37: #{tpu_custom_call.1} parent=1 // pred_fallthru
      _
    %s45 = scalar_lea.vmem %s5, 16
    %s46 = scalar_lea.vmem %s5, 16
    %p48 = scmp.eq.s32.totalorder 0, 0
    // Predicated region
    $region38: #{tpu_custom_call.1} parent=1 // pred_check
      %p49 = pneg %p48
    $region39: #{tpu_custom_call.1} parent=1 // pred_check_branch
      %51 = sbr.rel (%p49) target = $region41
    $region40: #{tpu_custom_call.1} parent=1 // pred_region
      %vm52 = vcmask 261120
      %53 = vst.msk [vmem:[#allocation2] sm:$0xff] %vm52, 0.0
      %54 = vst.msk [vmem:[#allocation2 + $0x8] sm:$0xff] %vm52, 0.0
      %55 = vst.msk [vmem:[#allocation2 + $0x10] sm:$0xff] %vm52, 0.0
      %56 = vst.msk [vmem:[#allocation2 + $0x18] sm:$0xff] %vm52, 0.0
      %v57 = vld [vmem:[%s0] sm:$0xff]
      %v58 = vld [vmem:[%s0 + $0x8] sm:$0xff]
      %v59 = vld [vmem:[%s0 + $0x10] sm:$0xff]
      %v60 = vld [vmem:[%s0 + $0x18] sm:$0xff]
      %v61 = vsel %vm52, %v57, 0.0
      %62 = vadd.xlane.f32.xlu0 %v61
      %v63 = vpop.xlane.xlu0 %62
      %v64 = vsel %vm52, %v58, 0.0
      %65 = vadd.xlane.f32.xlu0 %v64
      %v66 = vpop.xlane.xlu0 %65
      %v67 = vsel %vm52, %v59, 0.0
      %68 = vadd.xlane.f32.xlu0 %v67
      %v69 = vpop.xlane.xlu0 %68
      %v70 = vsel %vm52, %v60, 0.0
      %71 = vadd.xlane.f32.xlu0 %v70
      %v72 = vpop.xlane.xlu0 %71
      %v73 = vrcp.pop 32.0
      %v74 = vmul.f32 %v63, %v73
      %v75 = vmul.f32 %v66, %v73
      %v76 = vmul.f32 %v69, %v73
      %v77 = vmul.f32 %v72, %v73
      %v78 = vsub.f32 %v57, %v74
      %v79 = vsub.f32 %v58, %v75
      %v80 = vsub.f32 %v59, %v76
      %v81 = vsub.f32 %v60, %v77
      %v82 = vmul.f32 %v78, %v78
      %v83 = vmul.f32 %v79, %v79
      %v84 = vmul.f32 %v80, %v80
      %v85 = vmul.f32 %v81, %v81
      %v86 = vsel %vm52, %v82, 0.0
      %87 = vadd.xlane.f32.xlu0 %v86
      %v88 = vpop.xlane.xlu0 %87
      %v89 = vsel %vm52, %v83, 0.0
      %90 = vadd.xlane.f32.xlu0 %v89
      %v91 = vpop.xlane.xlu0 %90
      %v92 = vsel %vm52, %v84, 0.0
      %93 = vadd.xlane.f32.xlu0 %v92
      %v94 = vpop.xlane.xlu0 %93
      %v95 = vsel %vm52, %v85, 0.0
      %96 = vadd.xlane.f32.xlu0 %v95
      %v97 = vpop.xlane.xlu0 %96
      %v98 = vmul.f32 %v88, %v73
      %v99 = vmul.f32 %v91, %v73
      %v100 = vmul.f32 %v94, %v73
      %v101 = vmul.f32 %v97, %v73
      %v102 = vadd.f32 %v98, 1e-05
      %v103 = vadd.f32 %v99, 1e-05
      %v104 = vadd.f32 %v100, 1e-05
      %v105 = vadd.f32 %v101, 1e-05
      %v106 = vrsqrt.pop %v102
      %v107 = vrsqrt.pop %v103
      %v108 = vrsqrt.pop %v104
      %v109 = vrsqrt.pop %v105
      %v110 = vmul.f32 %v78, %v106
      %v111 = vmul.f32 %v79, %v107
      %v112 = vmul.f32 %v80, %v108
      %v113 = vmul.f32 %v81, %v109
      %v114 = vld [vmem:[%s2] sm:$0x1]
      %v116 = vlaneseq
      %v117 = vshrl.u32 %v116, 7
      %v118 = vsub.s32 0, %v117
      %v119 = vrot.slane %v114, %v118
      %v121 = vmul.f32 %v110, %v119
      %v122 = vmul.f32 %v111, %v119
      %v123 = vmul.f32 %v112, %v119
      %v124 = vmul.f32 %v113, %v119
      %v125 = vld [vmem:[%s3] sm:$0x1]
      %v127 = vlaneseq
      %v128 = vshrl.u32 %v127, 7
      %v129 = vsub.s32 0, %v128
      %v130 = vrot.slane %v125, %v129
      %v132 = vadd.f32 %v121, %v130
      %v133 = vadd.f32 %v122, %v130
      %v134 = vadd.f32 %v123, %v130
      %v135 = vadd.f32 %v124, %v130
      %v136 = vpack.c.bf16 %v133, %v132
      %v137 = vpack.c.bf16 %v135, %v134
      %138 = vst.msk [vmem:[#allocation3] sm:$0xff] %vm52, %v136
      %139 = vst.msk [vmem:[#allocation3 + $0x8] sm:$0xff] %vm52, %v137
      %v140 = vld [vmem:[%s1] sm:$0xff]
      %v141 = vld [vmem:[%s1 + $0x8] sm:$0xff]
      %v142 = vld [vmem:[%s1 + $0x10] sm:$0xff]
      %v143 = vld [vmem:[%s1 + $0x18] sm:$0xff]
      %v144 = vpack.c.bf16 %v141, %v140
      %v145 = vpack.c.bf16 %v143, %v142
      %146 = vst.msk [vmem:[#allocation4] sm:$0xff] %vm52, %v144
      %147 = vst.msk [vmem:[#allocation4 + $0x8] sm:$0xff] %vm52, %v145
    $region41: #{tpu_custom_call.1} parent=1 // pred_fallthru
      _
    %v148 = vld [vmem:[#allocation3] sm:$0xff]
    %v149 = vld [vmem:[#allocation3 + $0x8] sm:$0xff]
    %v150 = vld [vmem:[#allocation5] sm:$0xf]
    %v151 = vld [vmem:[#allocation5 + $0x4] sm:$0xf]
    %v152 = vld [vmem:[#allocation5 + $0x8] sm:$0xf]
    %v153 = vld [vmem:[#allocation5 + $0xc] sm:$0xf]
    %v154 = vld [vmem:[#allocation4] sm:$0xff]
    %v155 = vld [vmem:[#allocation4 + $0x8] sm:$0xff]
    %v156 = vld [vmem:[%s46] sm:$0xf]
    %v157 = vld [vmem:[%s46 + $0x4] sm:$0xf]
    %v158 = vld [vmem:[%s46 + $0x8] sm:$0xf]
    %v159 = vld [vmem:[%s46 + $0xc] sm:$0xf]
    %v164 = vunpack.c.l.b16 %v156
    %v165 = vunpack.c.l.b16 %v157
    %v166 = vunpack.c.l.b16 %v158
    %v167 = vunpack.c.l.b16 %v159
    %v168 = vpack.c.b16 %v165, %v164
    %v169 = vpack.c.b16 %v167, %v166
    %vm172 = vcmask 261120
    %v174 = vsel %vm172, %v154, 0
    %v177 = vsel %vm172, %v155, 0
    %179 = vmatprep.subr.bf16.mxu0 0
    %180 = vmatpush1.bf16.msra.mxu0 %v168
    %181 = vmatprep.subr.bf16.mxu0 0
    %182 = vmatpush1.bf16.msra.mxu0 %v169
    %183 = vmatprep.subr.bf16.mxu0 0
    %184 = vmatpush1.bf16.msra.mxu0 0
    %185 = vmatprep.subr.bf16.mxu0 0
    %186 = vmatpush1.bf16.msra.mxu0 0
    %187 = vmatprep.subr.bf16.mxu0 0
    %188 = vmatpush1.bf16.msra.mxu0 0
    %189 = vmatprep.subr.bf16.mxu0 0
    %190 = vmatpush1.bf16.msra.mxu0 0
    %191 = vmatprep.subr.bf16.mxu0 0
    %192 = vmatpush1.bf16.msra.mxu0 0
    %193 = vmatprep.subr.bf16.mxu0 0
    %194 = vmatpush1.bf16.msra.mxu0 0
    %195 = vmatprep.subr.bf16.mxu0 0
    %196 = vmatpush1.bf16.msra.mxu0 0
    %197 = vmatprep.subr.bf16.mxu0 0
    %198 = vmatpush1.bf16.msra.mxu0 0
    %199 = vmatprep.subr.bf16.mxu0 0
    %200 = vmatpush1.bf16.msra.mxu0 0
    %201 = vmatprep.subr.bf16.mxu0 0
    %202 = vmatpush1.bf16.msra.mxu0 0
    %203 = vmatprep.subr.bf16.mxu0 0
    %204 = vmatpush1.bf16.msra.mxu0 0
    %205 = vmatprep.subr.bf16.mxu0 0
    %206 = vmatpush1.bf16.msra.mxu0 0
    %207 = vmatprep.subr.bf16.mxu0 0
    %208 = vmatpush1.bf16.msra.mxu0 0
    %209 = vmatprep.subr.bf16.mxu0 0
    %210 = vmatpush1.bf16.msra.mxu0 0
    %211 = vmatprep.mubr.bf16.mxu0 0
    %212 = vmatmul.mubr.bf16.gmra.mrb[0].mxu0 %v174
    %v213 = vpop.f32.mrb[0].mxu0
    %v214 = vadd.f32 0.0, %v213
    %v215 = vpop.f32.mrb[0].mxu0
    %v216 = vpop.f32.mrb[0].mxu0
    %v217 = vadd.f32 0.0, %v216
    %v218 = vpop.f32.mrb[0].mxu0
    %219 = vmatprep.mubr.bf16.mxu0 0
    %220 = vmatmul.mubr.bf16.gmra.mrb[0].mxu0 %v177
    %v221 = vpop.f32.mrb[0].mxu0
    %v222 = vadd.f32 0.0, %v221
    %v223 = vpop.f32.mrb[0].mxu0
    %v224 = vpop.f32.mrb[0].mxu0
    %v225 = vadd.f32 0.0, %v224
    %v226 = vpop.f32.mrb[0].mxu0
    %227 = vdwg.mxu0
    %v232 = vunpack.c.l.b16 %v150
    %v233 = vunpack.c.l.b16 %v151
    %v234 = vunpack.c.l.b16 %v152
    %v235 = vunpack.c.l.b16 %v153
    %v236 = vpack.c.b16 %v233, %v232
    %v237 = vpack.c.b16 %v235, %v234
    %v241 = vsel %vm172, %v148, 0
    %v244 = vsel %vm172, %v149, 0
    %246 = vmatprep.subr.bf16.mxu0 0
    %247 = vmatpush1.bf16.msra.mxu0 %v236
    %248 = vmatprep.subr.bf16.mxu0 0
    %249 = vmatpush1.bf16.msra.mxu0 %v237
    %250 = vmatprep.subr.bf16.mxu0 0
    %251 = vmatpush1.bf16.msra.mxu0 0
    %252 = vmatprep.subr.bf16.mxu0 0
    %253 = vmatpush1.bf16.msra.mxu0 0
    %254 = vmatprep.subr.bf16.mxu0 0
    %255 = vmatpush1.bf16.msra.mxu0 0
    %256 = vmatprep.subr.bf16.mxu0 0
    %257 = vmatpush1.bf16.msra.mxu0 0
    %258 = vmatprep.subr.bf16.mxu0 0
    %259 = vmatpush1.bf16.msra.mxu0 0
    %260 = vmatprep.subr.bf16.mxu0 0
    %261 = vmatpush1.bf16.msra.mxu0 0
    %262 = vmatprep.subr.bf16.mxu0 0
    %263 = vmatpush1.bf16.msra.mxu0 0
    %264 = vmatprep.subr.bf16.mxu0 0
    %265 = vmatpush1.bf16.msra.mxu0 0
    %266 = vmatprep.subr.bf16.mxu0 0
    %267 = vmatpush1.bf16.msra.mxu0 0
    %268 = vmatprep.subr.bf16.mxu0 0
    %269 = vmatpush1.bf16.msra.mxu0 0
    %270 = vmatprep.subr.bf16.mxu0 0
    %271 = vmatpush1.bf16.msra.mxu0 0
    %272 = vmatprep.subr.bf16.mxu0 0
    %273 = vmatpush1.bf16.msra.mxu0 0
    %274 = vmatprep.subr.bf16.mxu0 0
    %275 = vmatpush1.bf16.msra.mxu0 0
    %276 = vmatprep.subr.bf16.mxu0 0
    %277 = vmatpush1.bf16.msra.mxu0 0
    %278 = vmatprep.mubr.bf16.mxu0 0
    %279 = vmatmul.mubr.bf16.gmra.mrb[0].mxu0 %v241
    %v280 = vpop.f32.mrb[0].mxu0
    %v281 = vadd.f32 %v214, %v280
    %v282 = vpop.f32.mrb[0].mxu0
    %v283 = vpop.f32.mrb[0].mxu0
    %v284 = vadd.f32 %v217, %v283
    %v285 = vpop.f32.mrb[0].mxu0
    %286 = vmatprep.mubr.bf16.mxu0 0
    %287 = vmatmul.mubr.bf16.gmra.mrb[0].mxu0 %v244
    %v288 = vpop.f32.mrb[0].mxu0
    %v289 = vadd.f32 %v222, %v288
    %v290 = vpop.f32.mrb[0].mxu0
    %v291 = vpop.f32.mrb[0].mxu0
    %v292 = vadd.f32 %v225, %v291
    %v293 = vpop.f32.mrb[0].mxu0
    %294 = vdwg.mxu0
    %v295 = vld [vmem:[%s6] sm:$0x1]
    %v297 = vlaneseq
    %v298 = vshrl.u32 %v297, 7
    %v299 = vsub.s32 0, %v298
    %v300 = vrot.slane %v295, %v299
    %v302 = vadd.f32 %v281, %v300
    %v303 = vadd.f32 %v284, %v300
    %v304 = vadd.f32 %v289, %v300
    %v305 = vadd.f32 %v292, %v300
    %v306 = vmul.f32 %v302, 0.5
    %v307 = vmul.f32 %v303, 0.5
    %v308 = vmul.f32 %v304, 0.5
    %v309 = vmul.f32 %v305, 0.5
    %v310 = vmul.f32 %v302, 0.7978846
    %v311 = vmul.f32 %v303, 0.7978846
    %v312 = vmul.f32 %v304, 0.7978846
    %v313 = vmul.f32 %v305, 0.7978846
    %v314 = vmul.f32 %v302, 0.044715
    %v315 = vmul.f32 %v303, 0.044715
    %v316 = vmul.f32 %v304, 0.044715
    %v317 = vmul.f32 %v305, 0.044715
    %v318 = vmul.f32 %v314, %v302
    %v319 = vmul.f32 %v315, %v303
    %v320 = vmul.f32 %v316, %v304
    %v321 = vmul.f32 %v317, %v305
    %v322 = vadd.f32 %v318, 1.0
    %v323 = vadd.f32 %v319, 1.0
    %v324 = vadd.f32 %v320, 1.0
    %v325 = vadd.f32 %v321, 1.0
    %v326 = vmul.f32 %v310, %v322
    %v327 = vmul.f32 %v311, %v323
    %v328 = vmul.f32 %v312, %v324
    %v329 = vmul.f32 %v313, %v325
    %v330 = vtanh.pop %v326
    %v331 = vtanh.pop %v327
    %v332 = vtanh.pop %v328
    %v333 = vtanh.pop %v329
    %v334 = vadd.f32 %v330, 1.0
    %v335 = vadd.f32 %v331, 1.0
    %v336 = vadd.f32 %v332, 1.0
    %v337 = vadd.f32 %v333, 1.0
    %v338 = vmul.f32 %v306, %v334
    %v339 = vmul.f32 %v307, %v335
    %v340 = vmul.f32 %v308, %v336
    %v341 = vmul.f32 %v309, %v337
    %v342 = vld [vmem:[#allocation2] sm:$0xff]
    %v343 = vld [vmem:[#allocation2 + $0x8] sm:$0xff]
    %v344 = vld [vmem:[#allocation2 + $0x10] sm:$0xff]
    %v345 = vld [vmem:[#allocation2 + $0x18] sm:$0xff]
    %v346 = vpack.c.bf16 %v339, %v338
    %v347 = vpack.c.bf16 %v341, %v340
    %v348 = vld [vmem:[%s7] sm:$0xf]
    %v349 = vld [vmem:[%s7 + $0x4] sm:$0xf]
    %v350 = vld [vmem:[%s7 + $0x8] sm:$0xf]
    %v351 = vld [vmem:[%s7 + $0xc] sm:$0xf]
    %v352 = vld [vmem:[%s7 + $0x10] sm:$0xf]
    %v353 = vld [vmem:[%s7 + $0x14] sm:$0xf]
    %v354 = vld [vmem:[%s7 + $0x18] sm:$0xf]
    %v355 = vld [vmem:[%s7 + $0x1c] sm:$0xf]
    %v356 = vld [vmem:[%s7 + $0x20] sm:$0xf]
    %v357 = vld [vmem:[%s7 + $0x24] sm:$0xf]
    %v358 = vld [vmem:[%s7 + $0x28] sm:$0xf]
    %v359 = vld [vmem:[%s7 + $0x2c] sm:$0xf]
    %v360 = vld [vmem:[%s7 + $0x30] sm:$0xf]
    %v361 = vld [vmem:[%s7 + $0x34] sm:$0xf]
    %v362 = vld [vmem:[%s7 + $0x38] sm:$0xf]
    %v363 = vld [vmem:[%s7 + $0x3c] sm:$0xf]
    %v380 = vunpack.c.l.b16 %v348
    %v381 = vunpack.c.l.b16 %v349
    %v382 = vunpack.c.l.b16 %v350
    %v383 = vunpack.c.l.b16 %v351
    %v384 = vunpack.c.l.b16 %v352
    %v385 = vunpack.c.l.b16 %v353
    %v386 = vunpack.c.l.b16 %v354
    %v387 = vunpack.c.l.b16 %v355
    %v388 = vunpack.c.l.b16 %v356
    %v389 = vunpack.c.l.b16 %v357
    %v390 = vunpack.c.l.b16 %v358
    %v391 = vunpack.c.l.b16 %v359
    %v392 = vunpack.c.l.b16 %v360
    %v393 = vunpack.c.l.b16 %v361
    %v394 = vunpack.c.l.b16 %v362
    %v395 = vunpack.c.l.b16 %v363
    %v396 = vpack.c.b16 %v381, %v380
    %v397 = vpack.c.b16 %v383, %v382
    %v398 = vpack.c.b16 %v385, %v384
    %v399 = vpack.c.b16 %v387, %v386
    %v400 = vpack.c.b16 %v389, %v388
    %v401 = vpack.c.b16 %v391, %v390
    %v402 = vpack.c.b16 %v393, %v392
    %v403 = vpack.c.b16 %v395, %v394
    %412 = vmatprep.subr.bf16.mxu0 0
    %413 = vmatpush1.bf16.msra.mxu0 %v396
    %414 = vmatprep.subr.bf16.mxu0 0
    %415 = vmatpush1.bf16.msra.mxu0 %v397
    %416 = vmatprep.subr.bf16.mxu0 0
    %417 = vmatpush1.bf16.msra.mxu0 %v398
    %418 = vmatprep.subr.bf16.mxu0 0
    %419 = vmatpush1.bf16.msra.mxu0 %v399
    %420 = vmatprep.subr.bf16.mxu0 0
    %421 = vmatpush1.bf16.msra.mxu0 %v400
    %422 = vmatprep.subr.bf16.mxu0 0
    %423 = vmatpush1.bf16.msra.mxu0 %v401
    %424 = vmatprep.subr.bf16.mxu0 0
    %425 = vmatpush1.bf16.msra.mxu0 %v402
    %426 = vmatprep.subr.bf16.mxu0 0
    %427 = vmatpush1.bf16.msra.mxu0 %v403
    %428 = vmatprep.subr.bf16.mxu0 0
    %429 = vmatpush1.bf16.msra.mxu0 0
    %430 = vmatprep.subr.bf16.mxu0 0
    %431 = vmatpush1.bf16.msra.mxu0 0
    %432 = vmatprep.subr.bf16.mxu0 0
    %433 = vmatpush1.bf16.msra.mxu0 0
    %434 = vmatprep.subr.bf16.mxu0 0
    %435 = vmatpush1.bf16.msra.mxu0 0
    %436 = vmatprep.subr.bf16.mxu0 0
    %437 = vmatpush1.bf16.msra.mxu0 0
    %438 = vmatprep.subr.bf16.mxu0 0
    %439 = vmatpush1.bf16.msra.mxu0 0
    %440 = vmatprep.subr.bf16.mxu0 0
    %441 = vmatpush1.bf16.msra.mxu0 0
    %442 = vmatprep.subr.bf16.mxu0 0
    %443 = vmatpush1.bf16.msra.mxu0 0
    %444 = vmatprep.mubr.bf16.mxu0 0
    %445 = vmatmul.mubr.bf16.gmra.mrb[0].mxu0 %v346
    %v446 = vpop.f32.mrb[0].mxu0
    %v447 = vadd.f32 0.0, %v446
    %v448 = vpop.f32.mrb[0].mxu0
    %v449 = vpop.f32.mrb[0].mxu0
    %v450 = vadd.f32 0.0, %v449
    %v451 = vpop.f32.mrb[0].mxu0
    %452 = vmatprep.mubr.bf16.mxu0 0
    %453 = vmatmul.mubr.bf16.gmra.mrb[0].mxu0 %v347
    %v454 = vpop.f32.mrb[0].mxu0
    %v455 = vadd.f32 0.0, %v454
    %v456 = vpop.f32.mrb[0].mxu0
    %v457 = vpop.f32.mrb[0].mxu0
    %v458 = vadd.f32 0.0, %v457
    %v459 = vpop.f32.mrb[0].mxu0
    %460 = vdwg.mxu0
    %v461 = vadd.f32 %v342, %v447
    %v462 = vadd.f32 %v343, %v450
    %v463 = vadd.f32 %v344, %v455
    %v464 = vadd.f32 %v345, %v458
    %465 = vst.msk [vmem:[#allocation2] sm:$0xff] %vm172, %v461
    %466 = vst.msk [vmem:[#allocation2 + $0x8] sm:$0xff] %vm172, %v462
    %467 = vst.msk [vmem:[#allocation2 + $0x10] sm:$0xff] %vm172, %v463
    %468 = vst.msk [vmem:[#allocation2 + $0x18] sm:$0xff] %vm172, %v464
    // Predicated region
    $region42: #{tpu_custom_call.1} parent=1 // pred_check
      %p469 = pneg %p48
    $region43: #{tpu_custom_call.1} parent=1 // pred_check_branch
      %471 = sbr.rel (%p469) target = $region45
    $region44: #{tpu_custom_call.1} parent=1 // pred_region
      %v472 = vld [vmem:[#allocation2] sm:$0xff]
      %v473 = vld [vmem:[#allocation2 + $0x8] sm:$0xff]
      %v474 = vld [vmem:[#allocation2 + $0x10] sm:$0xff]
      %v475 = vld [vmem:[#allocation2 + $0x18] sm:$0xff]
      %476 = vst.msk [vmem:[#allocation8] sm:$0xff] %vm172, %v472
      %477 = vst.msk [vmem:[#allocation8 + $0x8] sm:$0xff] %vm172, %v473
      %478 = vst.msk [vmem:[#allocation8 + $0x10] sm:$0xff] %vm172, %v474
      %479 = vst.msk [vmem:[#allocation8 + $0x18] sm:$0xff] %vm172, %v475
    $region45: #{tpu_custom_call.1} parent=1 // pred_fallthru
      _
    // Predicated region
    $region46: #{tpu_custom_call.1} parent=1 // pred_check
      _
    $region47: #{tpu_custom_call.1} parent=1 // pred_check_branch
      %481 = sbr.rel (0) target = $region49
    $region48: #{tpu_custom_call.1} parent=1 // pred_region
      %s483 = ssub.s32 512, 512
      %484 = vsyncadd [#allocation7], %s483
      %s485 = sshll.u32 [#allocation8], 4
      %s486 = int_to_ptr.vmem [resolvable:$true] %s485
      %491 = dma.vmem_to_hbm [thread:$0]  %s486, 512, %s8, [#allocation7], 128, 128, 8
    $region49: #{tpu_custom_call.1} parent=1 // pred_fallthru
      _
    // Predicated region
    $region50: #{tpu_custom_call.1} parent=1 // pred_check
      _
    $region51: #{tpu_custom_call.1} parent=1 // pred_check_branch
      %493 = sbr.rel (0) target = $region53
    $region52: #{tpu_custom_call.1} parent=1 // pred_region
      %494 = dma.done [#allocation7], 512
    $region53: #{tpu_custom_call.1} parent=1 // pred_fallthru
      _
    %495 = vsyncpa [#allocation6], 1
    %496 = vsyncpa [#allocation7], 1

</llo_original>
